<compile_context>
chip_gen: v7x
topology: tpu7x:2x2x1
jax: 0.10.0
libtpu: 0.0.40
codegen_flags: <defaults>
</compile_context>

<pallas_src>
import jax
import jax.numpy as jnp
from jax.experimental import pallas as pl
from jax.experimental.pallas import tpu as pltpu


def _round_up(x: int, m: int) -> int:
    return ((x + m - 1) // m) * m


def _residual_linear_kernel(x_full_ref, x_res_ref, w_ref, b_ref, o_ref):
    """o[:, n-tile] = x[:, n-tile] + (x @ W[:, n-tile] + b[n-tile])."""
    # fn(x): bf16 operands on the MXU, f32 accumulation.
    x_bf16 = x_full_ref[...].astype(jnp.bfloat16)           # (tile_m, H)
    fn = jnp.dot(x_bf16, w_ref[...],                         # (H, tile_n) bf16
                 preferred_element_type=jnp.float32)         # (tile_m, tile_n) f32
    fn = fn + b_ref[...]                                     # bias broadcast (f32)
    # Residual add in f32, store in the output dtype.
    o_ref[...] = (x_res_ref[...].astype(jnp.float32) + fn).astype(o_ref.dtype)


def residual_linear(x, w, b, *, tile_m=512, tile_n=256):
    """x: (B, S, H), w: (H, H), b: (H,) or (1, H) -> (B, S, H) = x + (x @ W + b)."""
    B, S, H = x.shape
    M = B * S
    x2 = x.reshape(M, H)
    w16 = w.astype(jnp.bfloat16)                  # halve resident weight VMEM / HBM
    b2 = jnp.asarray(b, dtype=jnp.float32).reshape(1, H)

    # Clamp tiles to the problem size while keeping (8, 128) block legality.
    tile_m = max(8, min(tile_m, _round_up(M, 8)))
    if H % tile_n != 0:
        tile_n = H                                # small / odd H: single N tile
    # TODO(synk): for very large H add a K grid axis + f32 VMEM accumulator
    # (init/finalize with pl.when, mark that axis "arbitrary").

    grid = (pl.cdiv(M, tile_m), H // tile_n)

    out = pl.pallas_call(
        _residual_linear_kernel,
        out_shape=jax.ShapeDtypeStruct((M, H), x.dtype),
        grid_spec=pltpu.PrefetchScalarGridSpec(
            num_scalar_prefetch=0,
            grid=grid,
            in_specs=[
                # Full rows of x for the contraction (block index constant in j,
                # so it is only re-fetched when the M tile changes).
                pl.BlockSpec((tile_m, H), lambda i, j: (i, 0)),
                # Matching N slice of x for the residual add.
                pl.BlockSpec((tile_m, tile_n), lambda i, j: (i, j)),
                # N tile of the bf16 weight; resident across the M axis.
                pl.BlockSpec((H, tile_n), lambda i, j: (0, j)),
                # N tile of the bias.
                pl.BlockSpec((1, tile_n), lambda i, j: (0, j)),
            ],
            out_specs=pl.BlockSpec((tile_m, tile_n), lambda i, j: (i, j)),
        ),
        compiler_params=pltpu.CompilerParams(
            # Both grid axes are independent -> shard across v7x's 2 TensorCores.
            dimension_semantics=("parallel", "parallel"),
            # Budget at (tile_m=512, tile_n=256, H=4096):
            #   2 x 8 MiB x-rows + 2 x 0.5 MiB x-res + 2 x 0.5 MiB out
            #   + 2 x 2 MiB bf16 weight + bias  ~= 22 MiB
            # i.e. under half of v7x's 64 MiB physical VMEM and within this
            # explicit limit on v5e (default scoped 16 MiB) / v6e as well.
            vmem_limit_bytes=64 * 1024 * 1024,
        ),
    )(x2, x2, w16, b2)
    return out.reshape(B, S, H)


if __name__ == "__main__":
    # Small shapes consistent with the residual-on-features pattern.
    B, S, H = 2, 64, 256
    key = jax.random.PRNGKey(0)
    kx, kw, kb = jax.random.split(key, 3)

    x = jax.random.normal(kx, (B, S, H), dtype=jnp.float32)
    # Deterministic parameters for the inner fn (Linear(H, H)).
    w = jax.random.normal(kw, (H, H), dtype=jnp.float32) * (1.0 / jnp.sqrt(H))
    b = jax.random.normal(kb, (1, H), dtype=jnp.float32) * 0.01

    # Exercise a 2x2 (M x N) grid at small shapes ...
    y_tiled = residual_linear(x, w, b, tile_m=64, tile_n=128)
    # ... and the default (large-tile) configuration.
    y = residual_linear(x, w, b)
    jax.block_until_ready((y, y_tiled))

    # Reference matching the kernel's math: bf16 MXU operands, f32 accumulate.
    x2 = x.reshape(B * S, H)
    fn_ref = jnp.dot(x2.astype(jnp.bfloat16), w.astype(jnp.bfloat16),
                     preferred_element_type=jnp.float32) + b
    y_ref = (x2.astype(jnp.float32) + fn_ref).astype(x.dtype).reshape(B, S, H)
    assert jnp.allclose(y, y_ref, atol=1e-3, rtol=1e-3), "mismatch vs bf16 reference"
    assert jnp.allclose(y_tiled, y_ref, atol=1e-3, rtol=1e-3), "tiled mismatch vs bf16 reference"

    # Loose sanity check against the full-f32 math (bf16 quantization noise only).
    y_f32_ref = x + (jnp.einsum("bsh,hk->bsk", x, w) + b[0])
    assert jnp.allclose(y, y_f32_ref, atol=1e-1, rtol=1e-1), "mismatch vs f32 reference"

    print("KERNEL_OK")
</pallas_src>

<mosaic_0001>
module attributes {stable_mosaic.version = 11 : i64} {
  func.func @_residual_linear_kernel(%arg0: i32, %arg1: i32, %arg2: memref<64x256xf32, #tpu.memory_space<vmem>>, %arg3: memref<64x128xf32, #tpu.memory_space<vmem>>, %arg4: memref<256x128xbf16, #tpu.memory_space<vmem>>, %arg5: memref<1x128xf32, #tpu.memory_space<vmem>>, %arg6: memref<64x128xf32, #tpu.memory_space<vmem>>) attributes {dimension_semantics = [#tpu.dimension_semantics<parallel>, #tpu.dimension_semantics<parallel>], iteration_bounds = array<i64: 2, 2>, scalar_prefetch = 0 : i64, scratch_operands = 0 : i64, tpu.core_type = #tpu.core_type<tc>, window_params = [{transform_indices = @transform_0, window_bounds = array<i64: 64, 256>}, {transform_indices = @transform_1, window_bounds = array<i64: 64, 128>}, {transform_indices = @transform_2, window_bounds = array<i64: 256, 128>}, {transform_indices = @transform_3, window_bounds = array<i64: 1, 128>}, {transform_indices = @transform_4, window_bounds = array<i64: 64, 128>}]} {
    %c0 = arith.constant 0 : index
    %c0_0 = arith.constant 0 : index
    %0 = vector.load %arg2[%c0, %c0_0] : memref<64x256xf32, #tpu.memory_space<vmem>>, vector<64x256xf32>
    %1 = arith.truncf %0 : vector<64x256xf32> to vector<64x256xbf16>
    %c0_1 = arith.constant 0 : index
    %c0_2 = arith.constant 0 : index
    %2 = vector.load %arg4[%c0_1, %c0_2] : memref<256x128xbf16, #tpu.memory_space<vmem>>, vector<256x128xbf16>
    %cst = arith.constant dense<0.000000e+00> : vector<64x128xf32>
    %3 = tpu.matmul %1, %2, %cst {dimension_numbers = #tpu.dot_dimension_numbers<[1], [0], [0], [1], [0, 0, 1, 1], [], []>} : vector<64x256xbf16>, vector<256x128xbf16>, vector<64x128xf32> -> vector<64x128xf32>
    %c0_3 = arith.constant 0 : index
    %c0_4 = arith.constant 0 : index
    %4 = vector.load %arg5[%c0_3, %c0_4] : memref<1x128xf32, #tpu.memory_space<vmem>>, vector<1x128xf32>
    %5 = vector.broadcast %4 : vector<1x128xf32> to vector<64x128xf32>
    %6 = arith.addf %3, %5 : vector<64x128xf32>
    %c0_5 = arith.constant 0 : index
    %c0_6 = arith.constant 0 : index
    %7 = vector.load %arg3[%c0_5, %c0_6] : memref<64x128xf32, #tpu.memory_space<vmem>>, vector<64x128xf32>
    %8 = arith.addf %7, %6 : vector<64x128xf32>
    %c0_7 = arith.constant 0 : index
    %c0_8 = arith.constant 0 : index
    %9 = vector.load %arg6[%c0_7, %c0_8] : memref<64x128xf32, #tpu.memory_space<vmem>>, vector<64x128xf32>
    tpu.vector_store %arg6[%c0_7, %c0_8], %8 {strides = array<i32>} : memref<64x128xf32, #tpu.memory_space<vmem>>, vector<64x128xf32>,
    return
  }
  func.func @transform_0(%arg0: i32, %arg1: i32) -> (i32, i32) {
    %c0_i32 = arith.constant 0 : i32
    %c0_i32_0 = arith.constant 0 : i32
    return %arg0, %c0_i32 : i32, i32
  }
  func.func @transform_1(%arg0: i32, %arg1: i32) -> (i32, i32) {
    %c0_i32 = arith.constant 0 : i32
    return %arg0, %arg1 : i32, i32
  }
  func.func @transform_2(%arg0: i32, %arg1: i32) -> (i32, i32) {
    %c0_i32 = arith.constant 0 : i32
    %c0_i32_0 = arith.constant 0 : i32
    return %c0_i32, %arg1 : i32, i32
  }
  func.func @transform_3(%arg0: i32, %arg1: i32) -> (i32, i32) {
    %c0_i32 = arith.constant 0 : i32
    %c0_i32_0 = arith.constant 0 : i32
    return %c0_i32, %arg1 : i32, i32
  }
  func.func @transform_4(%arg0: i32, %arg1: i32) -> (i32, i32) {
    %c0_i32 = arith.constant 0 : i32
    return %arg0, %arg1 : i32, i32
  }
}

</mosaic_0001>

<llo_original>
// kernel: tpu_custom_call.1
$region0: #{tpu_custom_call.1}
  #allocation0 [shape = 'u32[]', space=smem, size = 0x4, offset = 0x4, fixed_abs, tag = 'smem constant byte address 0x4 - core index']
  #allocation1 [shape = 'u32[144,128]{1,0:T(1,128)}', space=vmem, size = 0x12000, scoped, tag = 'internal scratch']
  %s0 = inlined_call_operand.hbm [shape: f32[128,256], index: 0, kind: input, shape index: {}]
  %s1 = inlined_call_operand.hbm [shape: f32[128,256], index: 1, kind: input, shape index: {}]
  %s2 = inlined_call_operand.hbm [shape: bf16[256,256], index: 2, kind: input, shape index: {}]
  %s3 = inlined_call_operand.hbm [shape: f32[1,256], index: 3, kind: input, shape index: {}]
  %s4 = inlined_call_operand.hbm [shape: f32[128,256], index: 4, kind: output, shape index: {}]
  %s5 = sld [smem:[#allocation0]]
  $region65: #{tpu_custom_call.1} parent=0
    _
  %s7 = ssub.s32 1, %s5
  %s8 = scalar_select 0, %s7, %s5
  $region1: #{tpu_custom_call.1} parent=0
    #allocation2 [shape = 'u8[131072]{0}', space=vmem, size = 0x20000, scoped, tag = 'input window, operand 0']
    #allocation3 [shape = 's32[2]{0}', space=sflag, size = 0x8, scoped, tag = 'scoped memory for tpu_custom_call.1']
    #allocation4 [shape = 's32[2]{0}', space=sflag, size = 0x8, scoped, tag = 'scoped memory for tpu_custom_call.1']
    #allocation5 [shape = 'u8[65536]{0}', space=vmem, size = 0x10000, scoped, tag = 'input window, operand 1']
    #allocation6 [shape = 's32[2]{0}', space=sflag, size = 0x8, scoped, tag = 'scoped memory for tpu_custom_call.1']
    #allocation7 [shape = 'u8[131072]{0}', space=vmem, size = 0x20000, scoped, tag = 'input window, operand 2']
    #allocation8 [shape = 'u8[1024]{0}', space=vmem, size = 0x400, scoped, tag = 'input window, operand 3']
    #allocation9 [shape = 's32[2]{0}', space=sflag, size = 0x8, scoped, tag = 'scoped memory for tpu_custom_call.1']
    #allocation10 [shape = 'u8[65536]{0}', space=vmem, size = 0x10000, scoped, tag = 'output window, operand 0']
    %9 = vsyncpa [#allocation3], 0
    %s10 = scalar_lea.sflag [#allocation3], 1
    %11 = vsyncpa %s10, 0
    %12 = vsyncpa [#allocation6], 0
    %s13 = scalar_lea.sflag [#allocation6], 1
    %14 = vsyncpa %s13, 0
    %15 = vsyncpa [#allocation9], 0
    %s16 = scalar_lea.sflag [#allocation9], 1
    %17 = vsyncpa %s16, 0
    %18 = vsyncpa [#allocation4], 0
    %s19 = scalar_lea.sflag [#allocation4], 1
    %20 = vsyncpa %s19, 0
    loop: start=0, step=1, limit=6
    $region2: #{tpu_custom_call.1} parent=1 // loop_pre_header
      _
    $region3: #{tpu_custom_call.1} parent=1 // loop_header
      %s22 = sphi 0, %s26
      %p23 = scmp.ge.s32.totalorder %s22, 6
      %s29 = sphi 0, %s41
      %s30 = sphi 0, %s37
      %s31 = sphi 0, %s29
      %s32 = sphi 0, %s30
      %s33 = sphi 0, %s31
      %s34 = sphi 0, %s32
      %s44 = sphi 0, %s46
      %s47 = sphi 0, %s44
      %s48 = sphi 0, %s47
      %s64 = sphi 0, %s48
      %s72 = sphi 0, %s74
      %s75 = sphi 0, %s72
      %s76 = sphi 0, %s75
      %s92 = sphi 0, %s76
      %s98 = sphi 0, %s100
      %s101 = sphi 0, %s98
      %s102 = sphi 0, %s101
      %s118 = sphi 0, %s102
      %s124 = sphi 0, %s126
      %s127 = sphi 0, %s124
      %s128 = sphi 0, %s127
      %s144 = sphi 0, %s128
      %s152 = sphi 0, %s154
      %s155 = sphi 0, %s152
      %s156 = sphi 0, %s155
      %s172 = sphi 0, %s156
    $region4: #{tpu_custom_call.1} parent=1 // loop_header_branch
      %25 = sbr.rel (%p23) target = $region8
    $region5: #{tpu_custom_call.1} parent=1 // loop_body
      %s27 = ssub.s32 %s22, 1
      %s28 = ssub.s32 %s22, 2
      %s35 = sadd.s32 1, %s30
      %p36 = scmp.ge.s32.totalorder %s35, 2
      %s37 = scalar_select %p36, 0, %s35
      %s38 = sadd.s32 1, %s29
      %s39 = scalar_select %p36, %s38, %s29
      %p40 = scmp.ge.s32.totalorder %s39, 2
      %s41 = scalar_select %p40, 0, %s39
      %s42 = ssub.s32 %s29, %s41
      %p43 = scmp.eq.s32.totalorder %s42, 0
      %s45 = sadd.s32 %s44, 1
      %s46 = scalar_select %p43, %s44, %s45
      %p49 = pneg %p43
      %p50 = scmp.eq.s32.totalorder %s22, 3
      %p51 = por %p49, %p50
      %p52 = scmp.ne.s32.totalorder %s44, %s47
      %p53 = scmp.eq.s32.totalorder %s22, 0
      %p54 = por %p52, %p53
      %p55 = scmp.ne.s32.totalorder %s44, %s47
      %p56 = scmp.eq.s32.totalorder %s27, 3
      %p57 = por %p55, %p56
      %p58 = scmp.ne.s32.totalorder %s47, %s48
      %p59 = scmp.eq.s32.totalorder %s27, 0
      %p60 = por %p58, %p59
      %p61 = scmp.ne.s32.totalorder %s47, %s48
      %p62 = scmp.eq.s32.totalorder %s28, 3
      %p63 = por %p61, %p62
      %p65 = scmp.ne.s32.totalorder %s48, %s64
      %p66 = scmp.eq.s32.totalorder %s28, 0
      %p67 = por %p65, %p66
      %s68 = ssub.s32 %s29, %s41
      %s69 = ssub.s32 %s30, %s37
      %s70 = sor.u32 %s68, %s69
      %p71 = scmp.eq.s32.totalorder %s70, 0
      %s73 = sadd.s32 %s72, 1
      %s74 = scalar_select %p71, %s72, %s73
      %p77 = pneg %p71
      %p78 = scmp.eq.s32.totalorder %s22, 3
      %p79 = por %p77, %p78
      %p80 = scmp.ne.s32.totalorder %s72, %s75
      %p81 = scmp.eq.s32.totalorder %s22, 0
      %p82 = por %p80, %p81
      %p83 = scmp.ne.s32.totalorder %s72, %s75
      %p84 = scmp.eq.s32.totalorder %s27, 3
      %p85 = por %p83, %p84
      %p86 = scmp.ne.s32.totalorder %s75, %s76
      %p87 = scmp.eq.s32.totalorder %s27, 0
      %p88 = por %p86, %p87
      %p89 = scmp.ne.s32.totalorder %s75, %s76
      %p90 = scmp.eq.s32.totalorder %s28, 3
      %p91 = por %p89, %p90
      %p93 = scmp.ne.s32.totalorder %s76, %s92
      %p94 = scmp.eq.s32.totalorder %s28, 0
      %p95 = por %p93, %p94
      %s96 = ssub.s32 %s30, %s37
      %p97 = scmp.eq.s32.totalorder %s96, 0
      %s99 = sadd.s32 %s98, 1
      %s100 = scalar_select %p97, %s98, %s99
      %p103 = pneg %p97
      %p104 = scmp.eq.s32.totalorder %s22, 3
      %p105 = por %p103, %p104
      %p106 = scmp.ne.s32.totalorder %s98, %s101
      %p107 = scmp.eq.s32.totalorder %s22, 0
      %p108 = por %p106, %p107
      %p109 = scmp.ne.s32.totalorder %s98, %s101
      %p110 = scmp.eq.s32.totalorder %s27, 3
      %p111 = por %p109, %p110
      %p112 = scmp.ne.s32.totalorder %s101, %s102
      %p113 = scmp.eq.s32.totalorder %s27, 0
      %p114 = por %p112, %p113
      %p115 = scmp.ne.s32.totalorder %s101, %s102
      %p116 = scmp.eq.s32.totalorder %s28, 3
      %p117 = por %p115, %p116
      %p119 = scmp.ne.s32.totalorder %s102, %s118
      %p120 = scmp.eq.s32.totalorder %s28, 0
      %p121 = por %p119, %p120
      %s122 = ssub.s32 %s30, %s37
      %p123 = scmp.eq.s32.totalorder %s122, 0
      %s125 = sadd.s32 %s124, 1
      %s126 = scalar_select %p123, %s124, %s125
      %p129 = pneg %p123
      %p130 = scmp.eq.s32.totalorder %s22, 3
      %p131 = por %p129, %p130
      %p132 = scmp.ne.s32.totalorder %s124, %s127
      %p133 = scmp.eq.s32.totalorder %s22, 0
      %p134 = por %p132, %p133
      %p135 = scmp.ne.s32.totalorder %s124, %s127
      %p136 = scmp.eq.s32.totalorder %s27, 3
      %p137 = por %p135, %p136
      %p138 = scmp.ne.s32.totalorder %s127, %s128
      %p139 = scmp.eq.s32.totalorder %s27, 0
      %p140 = por %p138, %p139
      %p141 = scmp.ne.s32.totalorder %s127, %s128
      %p142 = scmp.eq.s32.totalorder %s28, 3
      %p143 = por %p141, %p142
      %p145 = scmp.ne.s32.totalorder %s128, %s144
      %p146 = scmp.eq.s32.totalorder %s28, 0
      %p147 = por %p145, %p146
      %s148 = ssub.s32 %s29, %s41
      %s149 = ssub.s32 %s30, %s37
      %s150 = sor.u32 %s148, %s149
      %p151 = scmp.eq.s32.totalorder %s150, 0
      %s153 = sadd.s32 %s152, 1
      %s154 = scalar_select %p151, %s152, %s153
      %p157 = pneg %p151
      %p158 = scmp.eq.s32.totalorder %s22, 3
      %p159 = por %p157, %p158
      %p160 = scmp.ne.s32.totalorder %s152, %s155
      %p161 = scmp.eq.s32.totalorder %s22, 0
      %p162 = por %p160, %p161
      %p163 = scmp.ne.s32.totalorder %s152, %s155
      %p164 = scmp.eq.s32.totalorder %s27, 3
      %p165 = por %p163, %p164
      %p166 = scmp.ne.s32.totalorder %s155, %s156
      %p167 = scmp.eq.s32.totalorder %s27, 0
      %p168 = por %p166, %p167
      %p169 = scmp.ne.s32.totalorder %s155, %s156
      %p170 = scmp.eq.s32.totalorder %s28, 3
      %p171 = por %p169, %p170
      %p173 = scmp.ne.s32.totalorder %s156, %s172
      %p174 = scmp.eq.s32.totalorder %s28, 0
      %p175 = por %p173, %p174
      %p176 = scmp.le.s32.totalorder 1, %s22
      %p177 = scmp.lt.s32.totalorder %s22, 5
      %p178 = pnand %p176, %p177
      %p179 = pneg %p178
      // Predicated region
      $region9: #{tpu_custom_call.1} parent=5 // pred_check
        _
      $region10: #{tpu_custom_call.1} parent=5 // pred_check_branch
        %181 = sbr.rel (%p178) target = $region12
      $region11: #{tpu_custom_call.1} parent=5 // pred_region
        %s182 = ssub.s32 %s22, 1
      $region12: #{tpu_custom_call.1} parent=5 // pred_fallthru
        _
      %p183 = scmp.lt.s32.totalorder %s22, 4
      // Predicated region
      $region13: #{tpu_custom_call.1} parent=5 // pred_check
        %p184 = pneg %p183
      $region14: #{tpu_custom_call.1} parent=5 // pred_check_branch
        %186 = sbr.rel (%p184) target = $region16
      $region15: #{tpu_custom_call.1} parent=5 // pred_region
        // Predicated region
        $region17: #{tpu_custom_call.1} parent=15 // pred_check
          %p187 = pneg %p54
        $region18: #{tpu_custom_call.1} parent=15 // pred_check_branch
          %189 = sbr.rel (%p187) target = $region20
        $region19: #{tpu_custom_call.1} parent=15 // pred_region
          %s190 = sand.u32 %s44, 1
          %s191 = scalar_lea.sflag [#allocation3], %s190
          %s192 = sand.u32 %s44, 1
          %s193 = smul.addr %s192, 128
          %s194 = scalar_lea.vmem [#allocation2], %s193
          %s195 = smul.u32 8, %s29
          %s197 = ssub.s32 2048, 2048
          %198 = vsyncadd %s191, %s197
          %s199 = smul.addr %s195, 2
          %s200 = smul.addr %s199, 128
          %s201 = scalar_lea.hbm %s0, %s200
          %s202 = sshll.u32 %s194, 4
          %s203 = int_to_ptr.vmem [resolvable:$true] %s202
          %208 = dma.hbm_to_vmem [thread:$0]  %s201, 2048, %s203, %s191, 256, 256, 16
        $region20: #{tpu_custom_call.1} parent=15 // pred_fallthru
          _
        // Predicated region
        $region21: #{tpu_custom_call.1} parent=15 // pred_check
          %p209 = pneg %p82
        $region22: #{tpu_custom_call.1} parent=15 // pred_check_branch
          %211 = sbr.rel (%p209) target = $region24
        $region23: #{tpu_custom_call.1} parent=15 // pred_region
          %s212 = sand.u32 %s22, 1
          %s213 = scalar_lea.sflag [#allocation6], %s212
          %s214 = sand.u32 %s72, 1
          %s215 = smul.addr %s214, 64
          %s216 = scalar_lea.vmem [#allocation5], %s215
          %s217 = smul.u32 8, %s29
          %s219 = ssub.s32 1024, 1024
          %220 = vsyncadd %s213, %s219
          %s221 = smul.addr %s217, 2
          %s222 = sadd.s32 %s30, %s221
          %s223 = smul.addr %s222, 128
          %s224 = scalar_lea.hbm %s1, %s223
          %s225 = sshll.u32 %s216, 4
          %s226 = int_to_ptr.vmem [resolvable:$true] %s225
          %231 = dma.hbm_to_vmem [thread:$0]  %s224, 1024, %s226, %s213, 256, 128, 8
        $region24: #{tpu_custom_call.1} parent=15 // pred_fallthru
          _
        // Predicated region
        $region25: #{tpu_custom_call.1} parent=15 // pred_check
          %p232 = pneg %p108
        $region26: #{tpu_custom_call.1} parent=15 // pred_check_branch
          %234 = sbr.rel (%p232) target = $region28
        $region27: #{tpu_custom_call.1} parent=15 // pred_region
          %s235 = sand.u32 %s22, 1
          %s236 = scalar_lea.sflag [#allocation6], %s235
          %s237 = sand.u32 %s98, 1
          %s238 = smul.addr %s237, 128
          %s239 = scalar_lea.vmem [#allocation7], %s238
          %s241 = ssub.s32 2048, 2048
          %242 = vsyncadd %s236, %s241
          %s243 = smul.addr %s30, 64
          %s244 = scalar_lea.hbm %s2, %s243
          %s245 = sshll.u32 %s239, 4
          %s246 = int_to_ptr.vmem [resolvable:$true] %s245
          %251 = dma.hbm_to_vmem [thread:$0]  %s244, 2048, %s246, %s236, 128, 64, 4
        $region28: #{tpu_custom_call.1} parent=15 // pred_fallthru
          _
        // Predicated region
        $region29: #{tpu_custom_call.1} parent=15 // pred_check
          %p252 = pneg %p134
        $region30: #{tpu_custom_call.1} parent=15 // pred_check_branch
          %254 = sbr.rel (%p252) target = $region32
        $region31: #{tpu_custom_call.1} parent=15 // pred_region
          %s255 = sand.u32 %s124, 1
          %s256 = scalar_lea.sflag [#allocation9], %s255
          %s257 = sand.u32 %s124, 1
          %s258 = scalar_lea.vmem [#allocation8], %s257
          %s260 = ssub.s32 16, 16
          %261 = vsyncadd %s256, %s260
          %s262 = smul.addr %s30, 16
          %s263 = scalar_lea.hbm %s3, %s262
          %s265 = sshll.u32 %s258, 4
          %s266 = int_to_ptr.vmem [resolvable:$true] %s265
          %268 = dma.hbm_to_vmem [thread:$0]  %s263, 16, %s266, %s256
        $region32: #{tpu_custom_call.1} parent=15 // pred_fallthru
          _
      $region16: #{tpu_custom_call.1} parent=5 // pred_fallthru
        _
      %p269 = scmp.le.s32.totalorder 1, %s22
      %p270 = scmp.lt.s32.totalorder %s22, 5
      %p271 = pnand %p269, %p270
      %p272 = pneg %p271
      // Predicated region
      $region33: #{tpu_custom_call.1} parent=5 // pred_check
        _
      $region34: #{tpu_custom_call.1} parent=5 // pred_check_branch
        %274 = sbr.rel (%p271) target = $region36
      $region35: #{tpu_custom_call.1} parent=5 // pred_region
        %s275 = ssub.s32 %s22, 1
        %s276 = sand.u32 %s47, 1
        %s277 = scalar_lea.sflag [#allocation3], %s276
        %s278 = sand.u32 %s47, 1
        %s279 = smul.addr %s278, 128
        %s280 = scalar_lea.vmem [#allocation2], %s279
        // Predicated region
        $region37: #{tpu_custom_call.1} parent=35 // pred_check
          %p281 = pneg %p60
        $region38: #{tpu_custom_call.1} parent=35 // pred_check_branch
          %283 = sbr.rel (%p281) target = $region40
        $region39: #{tpu_custom_call.1} parent=35 // pred_region
          %284 = dma.done %s277, 2048
        $region40: #{tpu_custom_call.1} parent=35 // pred_fallthru
          _
        %s285 = sand.u32 %s27, 1
        %s286 = scalar_lea.sflag [#allocation6], %s285
        %s287 = sand.u32 %s75, 1
        %s288 = smul.addr %s287, 64
        %s289 = scalar_lea.vmem [#allocation5], %s288
        // Predicated region
        $region41: #{tpu_custom_call.1} parent=35 // pred_check
          %p290 = pneg %p88
        $region42: #{tpu_custom_call.1} parent=35 // pred_check_branch
          %292 = sbr.rel (%p290) target = $region44
        $region43: #{tpu_custom_call.1} parent=35 // pred_region
          %293 = dma.done %s286, 1024
        $region44: #{tpu_custom_call.1} parent=35 // pred_fallthru
          _
        %s294 = sand.u32 %s27, 1
        %s295 = scalar_lea.sflag [#allocation6], %s294
        %s296 = sand.u32 %s101, 1
        %s297 = smul.addr %s296, 128
        %s298 = scalar_lea.vmem [#allocation7], %s297
        // Predicated region
        $region45: #{tpu_custom_call.1} parent=35 // pred_check
          %p299 = pneg %p114
        $region46: #{tpu_custom_call.1} parent=35 // pred_check_branch
          %301 = sbr.rel (%p299) target = $region48
        $region47: #{tpu_custom_call.1} parent=35 // pred_region
          %302 = dma.done %s295, 2048
        $region48: #{tpu_custom_call.1} parent=35 // pred_fallthru
          _
        %s303 = sand.u32 %s127, 1
        %s304 = scalar_lea.sflag [#allocation9], %s303
        %s305 = sand.u32 %s127, 1
        %s306 = scalar_lea.vmem [#allocation8], %s305
        // Predicated region
        $region49: #{tpu_custom_call.1} parent=35 // pred_check
          %p307 = pneg %p140
        $region50: #{tpu_custom_call.1} parent=35 // pred_check_branch
          %309 = sbr.rel (%p307) target = $region52
        $region51: #{tpu_custom_call.1} parent=35 // pred_region
          %310 = dma.done %s304, 16
        $region52: #{tpu_custom_call.1} parent=35 // pred_fallthru
          _
        %s311 = sand.u32 %s47, 1
        %s312 = scalar_lea.sflag [#allocation3], %s311
        %s313 = sand.u32 %s47, 1
        %s314 = smul.addr %s313, 128
        %s315 = scalar_lea.vmem [#allocation2], %s314
        %p316 = pneg %p60
        %p317 = pneg %p57
        %s318 = sand.u32 %s27, 1
        %s319 = scalar_lea.sflag [#allocation6], %s318
        %s320 = sand.u32 %s75, 1
        %s321 = smul.addr %s320, 64
        %s322 = scalar_lea.vmem [#allocation5], %s321
        %p323 = pneg %p88
        %p324 = pneg %p85
        %s325 = sand.u32 %s27, 1
        %s326 = scalar_lea.sflag [#allocation6], %s325
        %s327 = sand.u32 %s101, 1
        %s328 = smul.addr %s327, 128
        %s329 = scalar_lea.vmem [#allocation7], %s328
        %p330 = pneg %p114
        %p331 = pneg %p111
        %s332 = sand.u32 %s127, 1
        %s333 = scalar_lea.sflag [#allocation9], %s332
        %s334 = sand.u32 %s127, 1
        %s335 = scalar_lea.vmem [#allocation8], %s334
        %p336 = pneg %p140
        %p337 = pneg %p137
        %p338 = pneg %p168
        %p339 = pneg %p165
        %s340 = sand.u32 %s155, 1
        %s341 = scalar_lea.sflag [#allocation4], %s340
        %s342 = sand.u32 %s155, 1
        %s343 = smul.addr %s342, 64
        %s344 = scalar_lea.vmem [#allocation10], %s343
        %s345 = smul.u32 8, %s31
        %s346 = smul.u32 8, %s31
        %s347 = smul.u32 8, %s31
        %v349 = vld [vmem:[%s280] sm:$0xff]
        %v350 = vld [vmem:[%s280 + $0x8] sm:$0xff]
        %v351 = vld [vmem:[%s280 + $0x10] sm:$0xff]
        %v352 = vld [vmem:[%s280 + $0x18] sm:$0xff]
        %v353 = vld [vmem:[%s280 + $0x20] sm:$0xff]
        %v354 = vld [vmem:[%s280 + $0x28] sm:$0xff]
        %v355 = vld [vmem:[%s280 + $0x30] sm:$0xff]
        %v356 = vld [vmem:[%s280 + $0x38] sm:$0xff]
        %v357 = vld [vmem:[%s280 + $0x40] sm:$0xff]
        %v358 = vld [vmem:[%s280 + $0x48] sm:$0xff]
        %v359 = vld [vmem:[%s280 + $0x50] sm:$0xff]
        %v360 = vld [vmem:[%s280 + $0x58] sm:$0xff]
        %v361 = vld [vmem:[%s280 + $0x60] sm:$0xff]
        %v362 = vld [vmem:[%s280 + $0x68] sm:$0xff]
        %v363 = vld [vmem:[%s280 + $0x70] sm:$0xff]
        %v364 = vld [vmem:[%s280 + $0x78] sm:$0xff]
        %v365 = vpack.c.bf16 %v351, %v349
        %v366 = vpack.c.bf16 %v352, %v350
        %v367 = vpack.c.bf16 %v355, %v353
        %v368 = vpack.c.bf16 %v356, %v354
        %v369 = vpack.c.bf16 %v359, %v357
        %v370 = vpack.c.bf16 %v360, %v358
        %v371 = vpack.c.bf16 %v363, %v361
        %v372 = vpack.c.bf16 %v364, %v362
        %v373 = vld [vmem:[%s298] sm:$0xf]
        %v374 = vld [vmem:[%s298 + $0x4] sm:$0xf]
        %v375 = vld [vmem:[%s298 + $0x8] sm:$0xf]
        %v376 = vld [vmem:[%s298 + $0xc] sm:$0xf]
        %v377 = vld [vmem:[%s298 + $0x10] sm:$0xf]
        %v378 = vld [vmem:[%s298 + $0x14] sm:$0xf]
        %v379 = vld [vmem:[%s298 + $0x18] sm:$0xf]
        %v380 = vld [vmem:[%s298 + $0x1c] sm:$0xf]
        %v381 = vld [vmem:[%s298 + $0x20] sm:$0xf]
        %v382 = vld [vmem:[%s298 + $0x24] sm:$0xf]
        %v383 = vld [vmem:[%s298 + $0x28] sm:$0xf]
        %v384 = vld [vmem:[%s298 + $0x2c] sm:$0xf]
        %v385 = vld [vmem:[%s298 + $0x30] sm:$0xf]
        %v386 = vld [vmem:[%s298 + $0x34] sm:$0xf]
        %v387 = vld [vmem:[%s298 + $0x38] sm:$0xf]
        %v388 = vld [vmem:[%s298 + $0x3c] sm:$0xf]
        %v389 = vld [vmem:[%s298 + $0x40] sm:$0xf]
        %v390 = vld [vmem:[%s298 + $0x44] sm:$0xf]
        %v391 = vld [vmem:[%s298 + $0x48] sm:$0xf]
        %v392 = vld [vmem:[%s298 + $0x4c] sm:$0xf]
        %v393 = vld [vmem:[%s298 + $0x50] sm:$0xf]
        %v394 = vld [vmem:[%s298 + $0x54] sm:$0xf]
        %v395 = vld [vmem:[%s298 + $0x58] sm:$0xf]
        %v396 = vld [vmem:[%s298 + $0x5c] sm:$0xf]
        %v397 = vld [vmem:[%s298 + $0x60] sm:$0xf]
        %v398 = vld [vmem:[%s298 + $0x64] sm:$0xf]
        %v399 = vld [vmem:[%s298 + $0x68] sm:$0xf]
        %v400 = vld [vmem:[%s298 + $0x6c] sm:$0xf]
        %v401 = vld [vmem:[%s298 + $0x70] sm:$0xf]
        %v402 = vld [vmem:[%s298 + $0x74] sm:$0xf]
        %v403 = vld [vmem:[%s298 + $0x78] sm:$0xf]
        %v404 = vld [vmem:[%s298 + $0x7c] sm:$0xf]
        %v405 = vld [vmem:[%s306] sm:$0x1]
        %v407 = vlaneseq
        %v408 = vshrl.u32 %v407, 7
        %v409 = vsub.s32 0, %v408
        %v410 = vrot.slane %v405, %v409
        %v444 = vunpack.c.l.b16 %v373
        %v445 = vunpack.c.l.b16 %v374
        %v446 = vunpack.c.l.b16 %v375
        %v447 = vunpack.c.l.b16 %v376
        %v448 = vunpack.c.l.b16 %v377
        %v449 = vunpack.c.l.b16 %v378
        %v450 = vunpack.c.l.b16 %v379
        %v451 = vunpack.c.l.b16 %v380
        %v452 = vunpack.c.l.b16 %v381
        %v453 = vunpack.c.l.b16 %v382
        %v454 = vunpack.c.l.b16 %v383
        %v455 = vunpack.c.l.b16 %v384
        %v456 = vunpack.c.l.b16 %v385
        %v457 = vunpack.c.l.b16 %v386
        %v458 = vunpack.c.l.b16 %v387
        %v459 = vunpack.c.l.b16 %v388
        %v460 = vunpack.c.l.b16 %v389
        %v461 = vunpack.c.l.b16 %v390
        %v462 = vunpack.c.l.b16 %v391
        %v463 = vunpack.c.l.b16 %v392
        %v464 = vunpack.c.l.b16 %v393
        %v465 = vunpack.c.l.b16 %v394
        %v466 = vunpack.c.l.b16 %v395
        %v467 = vunpack.c.l.b16 %v396
        %v468 = vunpack.c.l.b16 %v397
        %v469 = vunpack.c.l.b16 %v398
        %v470 = vunpack.c.l.b16 %v399
        %v471 = vunpack.c.l.b16 %v400
        %v472 = vunpack.c.l.b16 %v401
        %v473 = vunpack.c.l.b16 %v402
        %v474 = vunpack.c.l.b16 %v403
        %v475 = vunpack.c.l.b16 %v404
        %v476 = vpack.c.b16 %v445, %v444
        %v477 = vpack.c.b16 %v447, %v446
        %v478 = vpack.c.b16 %v449, %v448
        %v479 = vpack.c.b16 %v451, %v450
        %v480 = vpack.c.b16 %v453, %v452
        %v481 = vpack.c.b16 %v455, %v454
        %v482 = vpack.c.b16 %v457, %v456
        %v483 = vpack.c.b16 %v459, %v458
        %v484 = vpack.c.b16 %v461, %v460
        %v485 = vpack.c.b16 %v463, %v462
        %v486 = vpack.c.b16 %v465, %v464
        %v487 = vpack.c.b16 %v467, %v466
        %v488 = vpack.c.b16 %v469, %v468
        %v489 = vpack.c.b16 %v471, %v470
        %v490 = vpack.c.b16 %v473, %v472
        %v491 = vpack.c.b16 %v475, %v474
        %508 = vmatprep.subr.bf16.mxu0 0
        %509 = vmatpush1.bf16.msra.mxu0 %v476
        %510 = vmatprep.subr.bf16.mxu0 0
        %511 = vmatpush1.bf16.msra.mxu0 %v477
        %512 = vmatprep.subr.bf16.mxu0 0
        %513 = vmatpush1.bf16.msra.mxu0 %v478
        %514 = vmatprep.subr.bf16.mxu0 0
        %515 = vmatpush1.bf16.msra.mxu0 %v479
        %516 = vmatprep.subr.bf16.mxu0 0
        %517 = vmatpush1.bf16.msra.mxu0 %v480
        %518 = vmatprep.subr.bf16.mxu0 0
        %519 = vmatpush1.bf16.msra.mxu0 %v481
        %520 = vmatprep.subr.bf16.mxu0 0
        %521 = vmatpush1.bf16.msra.mxu0 %v482
        %522 = vmatprep.subr.bf16.mxu0 0
        %523 = vmatpush1.bf16.msra.mxu0 %v483
        %524 = vmatprep.subr.bf16.mxu0 0
        %525 = vmatpush1.bf16.msra.mxu0 %v484
        %526 = vmatprep.subr.bf16.mxu0 0
        %527 = vmatpush1.bf16.msra.mxu0 %v485
        %528 = vmatprep.subr.bf16.mxu0 0
        %529 = vmatpush1.bf16.msra.mxu0 %v486
        %530 = vmatprep.subr.bf16.mxu0 0
        %531 = vmatpush1.bf16.msra.mxu0 %v487
        %532 = vmatprep.subr.bf16.mxu0 0
        %533 = vmatpush1.bf16.msra.mxu0 %v488
        %534 = vmatprep.subr.bf16.mxu0 0
        %535 = vmatpush1.bf16.msra.mxu0 %v489
        %536 = vmatprep.subr.bf16.mxu0 0
        %537 = vmatpush1.bf16.msra.mxu0 %v490
        %538 = vmatprep.subr.bf16.mxu0 0
        %539 = vmatpush1.bf16.msra.mxu0 %v491
        %540 = vmatprep.mubr.bf16.mxu0 %v366
        %541 = vmatmul.mubr.bf16.gmra.mrb[0].mxu0 %v365
        %v542 = vpop.f32.mrb[0].mxu0
        %v543 = vadd.f32 %v410, %v542
        %v544 = vpop.f32.mrb[0].mxu0
        %v545 = vpop.f32.mrb[0].mxu0
        %v546 = vadd.f32 %v410, %v545
        %v547 = vpop.f32.mrb[0].mxu0
        %548 = vmatprep.mubr.bf16.mxu0 %v368
        %549 = vmatmul.mubr.bf16.gmra.mrb[0].mxu0 %v367
        %v550 = vpop.f32.mrb[0].mxu0
        %v551 = vadd.f32 %v410, %v550
        %v552 = vpop.f32.mrb[0].mxu0
        %v553 = vpop.f32.mrb[0].mxu0
        %v554 = vadd.f32 %v410, %v553
        %v555 = vpop.f32.mrb[0].mxu0
        %556 = vmatprep.mubr.bf16.mxu0 %v370
        %557 = vmatmul.mubr.bf16.gmra.mrb[0].mxu0 %v369
        %v558 = vpop.f32.mrb[0].mxu0
        %v559 = vadd.f32 %v410, %v558
        %v560 = vpop.f32.mrb[0].mxu0
        %v561 = vpop.f32.mrb[0].mxu0
        %v562 = vadd.f32 %v410, %v561
        %v563 = vpop.f32.mrb[0].mxu0
        %564 = vmatprep.mubr.bf16.mxu0 %v372
        %565 = vmatmul.mubr.bf16.gmra.mrb[0].mxu0 %v371
        %v566 = vpop.f32.mrb[0].mxu0
        %v567 = vadd.f32 %v410, %v566
        %v568 = vpop.f32.mrb[0].mxu0
        %v569 = vpop.f32.mrb[0].mxu0
        %v570 = vadd.f32 %v410, %v569
        %v571 = vpop.f32.mrb[0].mxu0
        %572 = vdwg.mxu0
        %v573 = vld [vmem:[%s289] sm:$0xff]
        %v574 = vld [vmem:[%s289 + $0x8] sm:$0xff]
        %v575 = vld [vmem:[%s289 + $0x10] sm:$0xff]
        %v576 = vld [vmem:[%s289 + $0x18] sm:$0xff]
        %v577 = vld [vmem:[%s289 + $0x20] sm:$0xff]
        %v578 = vld [vmem:[%s289 + $0x28] sm:$0xff]
        %v579 = vld [vmem:[%s289 + $0x30] sm:$0xff]
        %v580 = vld [vmem:[%s289 + $0x38] sm:$0xff]
        %v581 = vadd.f32 %v573, %v543
        %v582 = vadd.f32 %v574, %v546
        %v583 = vadd.f32 %v575, %v551
        %v584 = vadd.f32 %v576, %v554
        %v585 = vadd.f32 %v577, %v559
        %v586 = vadd.f32 %v578, %v562
        %v587 = vadd.f32 %v579, %v567
        %v588 = vadd.f32 %v580, %v570
        %589 = vst [vmem:[%s344] sm:$0xff] %v581
        %590 = vst [vmem:[%s344 + $0x8] sm:$0xff] %v582
        %591 = vst [vmem:[%s344 + $0x10] sm:$0xff] %v583
        %592 = vst [vmem:[%s344 + $0x18] sm:$0xff] %v584
        %593 = vst [vmem:[%s344 + $0x20] sm:$0xff] %v585
        %594 = vst [vmem:[%s344 + $0x28] sm:$0xff] %v586
        %595 = vst [vmem:[%s344 + $0x30] sm:$0xff] %v587
        %596 = vst [vmem:[%s344 + $0x38] sm:$0xff] %v588
        %s597 = sand.u32 %s155, 1
        %s598 = scalar_lea.sflag [#allocation4], %s597
        %s599 = sand.u32 %s155, 1
        %s600 = smul.addr %s599, 64
        %s601 = scalar_lea.vmem [#allocation10], %s600
        // Predicated region
        $region53: #{tpu_custom_call.1} parent=35 // pred_check
          %p602 = pneg %p165
        $region54: #{tpu_custom_call.1} parent=35 // pred_check_branch
          %604 = sbr.rel (%p602) target = $region56
        $region55: #{tpu_custom_call.1} parent=35 // pred_region
          %s605 = smul.u32 8, %s31
          %s607 = ssub.s32 1024, 1024
          %608 = vsyncadd %s598, %s607
          %s609 = smul.addr %s605, 2
          %s610 = sadd.s32 %s32, %s609
          %s611 = smul.addr %s610, 128
          %s612 = scalar_lea.hbm %s4, %s611
          %s613 = sshll.u32 %s601, 4
          %s614 = int_to_ptr.vmem [resolvable:$true] %s613
          %619 = dma.vmem_to_hbm [thread:$0]  %s614, 1024, %s612, %s598, 128, 256, 8
        $region56: #{tpu_custom_call.1} parent=35 // pred_fallthru
          _
      $region36: #{tpu_custom_call.1} parent=5 // pred_fallthru
        _
      %p620 = scmp.le.s32.totalorder 2, %s22
      // Predicated region
      $region57: #{tpu_custom_call.1} parent=5 // pred_check
        %p621 = pneg %p620
      $region58: #{tpu_custom_call.1} parent=5 // pred_check_branch
        %623 = sbr.rel (%p621) target = $region60
      $region59: #{tpu_custom_call.1} parent=5 // pred_region
        %s624 = ssub.s32 %s22, 2
        // Predicated region
        $region61: #{tpu_custom_call.1} parent=59 // pred_check
          %p625 = pneg %p171
        $region62: #{tpu_custom_call.1} parent=59 // pred_check_branch
          %627 = sbr.rel (%p625) target = $region64
        $region63: #{tpu_custom_call.1} parent=59 // pred_region
          %s628 = sand.u32 %s156, 1
          %s629 = scalar_lea.sflag [#allocation4], %s628
          %s630 = sand.u32 %s156, 1
          %s631 = smul.addr %s630, 64
          %s632 = scalar_lea.vmem [#allocation10], %s631
          %633 = dma.done %s629, 1024
        $region64: #{tpu_custom_call.1} parent=59 // pred_fallthru
          _
      $region60: #{tpu_custom_call.1} parent=5 // pred_fallthru
        _
    $region6: #{tpu_custom_call.1} parent=1 // loop_footer
      %s26 = sadd.s32 1, %s22
    $region7: #{tpu_custom_call.1} parent=1 // loop_footer_branch
      %21 = sbr.rel target = $region3
    $region8: #{tpu_custom_call.1} parent=1 // loop_exit
      _
    %634 = vsyncpa [#allocation3], 1
    %s635 = scalar_lea.sflag [#allocation3], 1
    %636 = vsyncpa %s635, 1
    %637 = vsyncpa [#allocation6], 1
    %s638 = scalar_lea.sflag [#allocation6], 1
    %639 = vsyncpa %s638, 1
    %640 = vsyncpa [#allocation9], 1
    %s641 = scalar_lea.sflag [#allocation9], 1
    %642 = vsyncpa %s641, 1
    %643 = vsyncpa [#allocation4], 1
    %s644 = scalar_lea.sflag [#allocation4], 1
    %645 = vsyncpa %s644, 1

</llo_original>
